<compile_context>
chip_gen: v6e
topology: v6e:2x2x1
jax: 0.10.0
libtpu: 0.0.40
codegen_flags: <defaults>
</compile_context>

<pallas_src>
import jax
import jax.numpy as jnp
from jax.experimental import pallas as pl
from jax.experimental.pallas import tpu as pltpu

LANE = 128


def _ste_kernel(thresh_ref, x_ref, o_ref):
    # thresh_ref: (1,) f32 scalar in SMEM (scalar prefetch)
    # x_ref:      (tile_rows, 128) tile in the input's native dtype
    # o_ref:      (tile_rows, 128) float32 tile
    o_ref[...] = (x_ref[...] > thresh_ref[0]).astype(jnp.float32)


def ste_forward(x, thresh, *, tile_rows=1024):
    """Pallas TPU implementation of STEFunction.forward (binarize by threshold).

    x:      any-shaped float array (e.g. NCHW conv activations)
    thresh: scalar threshold (python scalar or 0-d array)
    returns float32 array of the same shape as x with entries in {0.0, 1.0}
    """
    orig_shape = x.shape
    n = x.size
    x_flat = x.reshape(-1)

    # Pad only when needed so the common case (n % 128 == 0) is a pure
    # metadata reshape with zero extra HBM traffic.
    rows = pl.cdiv(n, LANE)
    padded_n = rows * LANE
    if padded_n != n:
        x_flat = jnp.pad(x_flat, (0, padded_n - n))
    x2d = x_flat.reshape(rows, LANE)

    # Large lane-dense tiles; keep sublane dim (8,)-aligned when tiling.
    # Footprint with double-buffered in+out at 1024 rows is ~2 MiB — well
    # under the scoped-VMEM defaults on v5e/v6e/v7x, no vmem_limit needed.
    if rows <= tile_rows:
        tr = rows                        # single full-extent block
    else:
        tr = max(8, (tile_rows // 8) * 8)
    grid_steps = pl.cdiv(rows, tr)       # ragged last block handled by Pallas

    thresh_arr = jnp.asarray(thresh, jnp.float32).reshape(1)

    out2d = pl.pallas_call(
        _ste_kernel,
        out_shape=jax.ShapeDtypeStruct((rows, LANE), jnp.float32),
        grid_spec=pltpu.PrefetchScalarGridSpec(
            num_scalar_prefetch=1,
            grid=(grid_steps,),
            in_specs=[pl.BlockSpec((tr, LANE), lambda i, thresh: (i, 0))],
            out_specs=pl.BlockSpec((tr, LANE), lambda i, thresh: (i, 0)),
        ),
        compiler_params=pltpu.CompilerParams(
            dimension_semantics=("parallel",)),  # shards grid across 2 TCs on v7x
    )(thresh_arr, x2d)

    out_flat = out2d.reshape(-1)
    if padded_n != n:
        out_flat = out_flat[:n]          # drop pad; pure metadata otherwise
    return out_flat.reshape(orig_shape)

    # TODO(synk): STE backward (hardtanh of grad_output) not wired up — wrap
    # ste_forward in jax.custom_vjp if gradients through this op are needed.


if __name__ == "__main__":
    key = jax.random.PRNGKey(0)
    x = jax.random.normal(key, (2, 4, 16, 16), dtype=jnp.float32)  # NCHW
    thresh = 0.25

    out = ste_forward(x, thresh)
    jax.block_until_ready(out)

    # correctness check against the reference semantics: (x > thresh).float()
    ref = (x > thresh).astype(jnp.float32)
    assert out.shape == x.shape and out.dtype == jnp.float32
    assert bool(jnp.all(out == ref))

    print("KERNEL_OK")
</pallas_src>

<mosaic_0001>
module attributes {stable_mosaic.version = 11 : i64} {
  func.func @_ste_kernel(%arg0: i32, %arg1: memref<1xf32, #tpu.memory_space<smem>>, %arg2: memref<16x128xf32, #tpu.memory_space<vmem>>, %arg3: memref<16x128xf32, #tpu.memory_space<vmem>>) attributes {dimension_semantics = [#tpu.dimension_semantics<parallel>], iteration_bounds = array<i64: 1>, scalar_prefetch = 1 : i64, scratch_operands = 0 : i64, tpu.core_type = #tpu.core_type<tc>, window_params = [{transform_indices = @transform_0, window_bounds = array<i64: 16, 128>}, {transform_indices = @transform_1, window_bounds = array<i64: 16, 128>}]} {
    %c0 = arith.constant 0 : index
    %c0_0 = arith.constant 0 : index
    %0 = vector.load %arg2[%c0, %c0_0] : memref<16x128xf32, #tpu.memory_space<vmem>>, vector<16x128xf32>
    %c0_1 = arith.constant 0 : index
    %1 = memref.load %arg1[%c0_1] : memref<1xf32, #tpu.memory_space<smem>>
    %2 = vector.broadcast %1 : f32 to vector<16x128xf32>
    %3 = arith.cmpf ogt, %0, %2 : vector<16x128xf32>
    %4 = arith.extui %3 : vector<16x128xi1> to vector<16x128xi32>
    %5 = arith.sitofp %4 : vector<16x128xi32> to vector<16x128xf32>
    %c0_2 = arith.constant 0 : index
    %c0_3 = arith.constant 0 : index
    %6 = vector.load %arg3[%c0_2, %c0_3] : memref<16x128xf32, #tpu.memory_space<vmem>>, vector<16x128xf32>
    tpu.vector_store %arg3[%c0_2, %c0_3], %5 {strides = array<i32>} : memref<16x128xf32, #tpu.memory_space<vmem>>, vector<16x128xf32>,
    return
  }
  func.func @transform_0(%arg0: i32, %arg1: memref<1xf32, #tpu.memory_space<smem>>) -> (i32, i32) {
    %c0_i32 = arith.constant 0 : i32
    %c0_i32_0 = arith.constant 0 : i32
    return %arg0, %c0_i32 : i32, i32
  }
  func.func @transform_1(%arg0: i32, %arg1: memref<1xf32, #tpu.memory_space<smem>>) -> (i32, i32) {
    %c0_i32 = arith.constant 0 : i32
    %c0_i32_0 = arith.constant 0 : i32
    return %arg0, %c0_i32 : i32, i32
  }
}

</mosaic_0001>

<llo_original>
// kernel: tpu_custom_call.1
$region0: #{tpu_custom_call.1}
  #allocation0 [shape = 'u32[]', space=smem, size = 0x4, offset = 0x4, fixed_abs, tag = 'smem constant byte address 0x4 - core index']
  #allocation1 [shape = 'u32[144,128]{1,0:T(1,128)}', space=vmem, size = 0x12000, scoped, tag = 'internal scratch']
  #allocation2 [shape = 's32[1]{0}', space=sflag, size = 0x4, scoped, tag = 'scoped memory for tpu_custom_call.1']
  #allocation3 [shape = 'f32[1]{0:T(128)S(6)}', space=smem, size = 0x200, scoped, tag = 'prefetched SMEM operand 0']
  %s0 = inlined_call_operand.<no memory space> [shape: f32[1], index: 0, kind: input, shape index: {}]
  %s1 = inlined_call_operand.hbm [shape: f32[16,128], index: 1, kind: input, shape index: {}]
  %s2 = inlined_call_operand.hbm [shape: f32[16,128], index: 2, kind: output, shape index: {}]
  %s3 = sld [smem:[#allocation0]]
  $region18: #{tpu_custom_call.1} parent=0
    _
  %s5 = ssub.s32 1, %s3
  %s6 = scalar_select 0, %s5, %s3
  %7 = sst [smem:[#allocation3]] %s0
  $region1: #{tpu_custom_call.1} parent=0
    #allocation4 [shape = 'u8[8192]{0}', space=vmem, size = 0x2000, scoped, tag = 'input window, operand 1, single buffered']
    #allocation5 [shape = 's32[1]{0}', space=sflag, size = 0x4, scoped, tag = 'scoped memory for tpu_custom_call.1']
    #allocation6 [shape = 's32[1]{0}', space=sflag, size = 0x4, scoped, tag = 'scoped memory for tpu_custom_call.1']
    #allocation7 [shape = 'u8[8192]{0}', space=vmem, size = 0x2000, scoped, tag = 'output window, operand 0, single buffered']
    %8 = vsyncpa [#allocation5], 0
    %9 = vsyncpa [#allocation6], 0
    // Predicated region
    $region2: #{tpu_custom_call.1} parent=1 // pred_check
      _
    $region3: #{tpu_custom_call.1} parent=1 // pred_check_branch
      %11 = sbr.rel (0) target = $region5
    $region4: #{tpu_custom_call.1} parent=1 // pred_region
      %s13 = ssub.s32 256, 256
      %14 = vsyncadd [#allocation5], %s13
      %s15 = sshll.u32 [#allocation4], 4
      %s16 = int_to_ptr.vmem [resolvable:$true] %s15
      %21 = dma.hbm_to_vmem [thread:$0]  %s1, 256, %s16, [#allocation5], 128, 128, 8
    $region5: #{tpu_custom_call.1} parent=1 // pred_fallthru
      _
    // Predicated region
    $region6: #{tpu_custom_call.1} parent=1 // pred_check
      _
    $region7: #{tpu_custom_call.1} parent=1 // pred_check_branch
      %23 = sbr.rel (0) target = $region9
    $region8: #{tpu_custom_call.1} parent=1 // pred_region
      %24 = dma.done [#allocation5], 256
    $region9: #{tpu_custom_call.1} parent=1 // pred_fallthru
      _
    %v25 = vld [vmem:[#allocation4] sm:$0xff]
    %v26 = vld [vmem:[#allocation4 + $0x8] sm:$0xff]
    %s27 = sld [smem:[#allocation3]]
    %v28 = vstv %s27
    %vm29 = vcmp.gt.f32.partialorder %v25, %v28
    %vm30 = vcmp.gt.f32.partialorder %v26, %v28
    %v31 = vsel %vm29, 1, 0
    %v32 = vsel %vm30, 1, 0
    %v33 = vcvt.s32.f32 %v31
    %v34 = vcvt.s32.f32 %v32
    %35 = vst [vmem:[#allocation7] sm:$0xff] %v33
    %36 = vst [vmem:[#allocation7 + $0x8] sm:$0xff] %v34
    // Predicated region
    $region10: #{tpu_custom_call.1} parent=1 // pred_check
      _
    $region11: #{tpu_custom_call.1} parent=1 // pred_check_branch
      %38 = sbr.rel (0) target = $region13
    $region12: #{tpu_custom_call.1} parent=1 // pred_region
      %s40 = ssub.s32 256, 256
      %41 = vsyncadd [#allocation6], %s40
      %s42 = sshll.u32 [#allocation7], 4
      %s43 = int_to_ptr.vmem [resolvable:$true] %s42
      %48 = dma.vmem_to_hbm [thread:$0]  %s43, 256, %s2, [#allocation6], 128, 128, 8
    $region13: #{tpu_custom_call.1} parent=1 // pred_fallthru
      _
    // Predicated region
    $region14: #{tpu_custom_call.1} parent=1 // pred_check
      _
    $region15: #{tpu_custom_call.1} parent=1 // pred_check_branch
      %50 = sbr.rel (0) target = $region17
    $region16: #{tpu_custom_call.1} parent=1 // pred_region
      %51 = dma.done [#allocation6], 256
    $region17: #{tpu_custom_call.1} parent=1 // pred_fallthru
      _
    %52 = vsyncpa [#allocation5], 1
    %53 = vsyncpa [#allocation6], 1

</llo_original>
